<compile_context>
chip_gen: v7x
topology: tpu7x:2x2x1
jax: 0.10.0
libtpu: 0.0.40
codegen_flags: <defaults>
</compile_context>

<pallas_src>
import jax
import jax.numpy as jnp
from jax.experimental import pallas as pl
from jax.experimental.pallas import tpu as pltpu


def _round_up(x, m):
    return (x + m - 1) // m * m


def _ceil_div(a, b):
    return -(-a // b)


def _tpu_chip_info():
    """Return (vmem_capacity_bytes, mxu_m_granularity, tensorcores_per_chip)."""
    kind = ""
    try:
        kind = jax.devices()[0].device_kind.lower()
    except Exception:
        pass
    cap = None
    try:
        cap = int(pltpu.get_tpu_info().vmem_capacity_bytes)
    except Exception:
        cap = None
    is_v7 = "7" in kind
    if cap is None:
        cap = (64 << 20) if is_v7 else (128 << 20)
    mxu_gran = 128 if "v5" in kind else 256   # v5e: 4x128x128 MXU; v6e/v7x: 2x256x256
    num_tc = 2 if is_v7 else 1                # v7x has 2 TensorCores per chip
    return cap, mxu_gran, num_tc


def _vmem_budget(cap):
    """Generation-aware scoped-VMEM plan (also passed as vmem_limit_bytes)."""
    if cap >= (128 << 20):            # v5e / v6e: default scoped limit (16/32 MiB)
        return 96 << 20               # is far below physical; raise it for big tiles.
    if cap >= (48 << 20):             # v7x: 64 MiB physical per TensorCore.
        return min(44 << 20, cap - (16 << 20))
    return max(cap // 2, 8 << 20)


def _lane_pad(n, mxu_gran):
    """Pad a lane (output) dim to 128, or to the full MXU width when that is cheap."""
    p128 = _round_up(n, 128)
    if mxu_gran > 128:
        p_mxu = _round_up(n, mxu_gran)
        if p_mxu <= p128 + p128 // 8:
            return p_mxu
    return p128


def emcint_kernel(x_ref, w1_ref, b1_ref, w2_ref, b2_ref, o_ref):
    # fc1: bf16 x @ bf16 W1 on the MXU with f32 accumulation; epilogue in f32.
    h = jnp.dot(x_ref[...], w1_ref[...], preferred_element_type=jnp.float32)
    h = jnp.maximum(h + b1_ref[...], 0.0)
    # fc2: cast the hidden activation back to bf16 for the MXU, accumulate in f32.
    # TODO(synk): optional fp8 weight/activation path on v7x (~2x MXU rate) pending
    # an accuracy check; not applicable to v5e/v6e.
    y = jnp.dot(h.astype(w2_ref.dtype), w2_ref[...],
                preferred_element_type=jnp.float32)
    y = jnp.maximum(y + b2_ref[...], 0.0)
    o_ref[...] = y.astype(o_ref.dtype)


def emcint_prepare(w1, b1, w2, b2):
    """One-time packing of the EMCINT parameters.

    Pads weights/biases to lane-dense layouts and casts the matmul operands to
    bf16. Call ONCE at init and reuse across forward calls -- doing it per call
    costs a full HBM round trip over both weight matrices.
    """
    cap, mxu_gran, num_tc = _tpu_chip_info()
    budget = _vmem_budget(cap)

    in_channel, mid_channel = w1.shape
    out_channel = w2.shape[1]
    in_p = _round_up(in_channel, 16)          # contraction dim: bf16 sublane gran only
    mid_p = _lane_pad(mid_channel, mxu_gran)  # lane dims stay 128/256-dense
    out_p = _lane_pad(out_channel, mxu_gran)

    w1p = jnp.zeros((in_p, mid_p), jnp.bfloat16).at[:in_channel, :mid_channel].set(
        w1.astype(jnp.bfloat16))
    b1p = jnp.zeros((1, mid_p), jnp.float32).at[:, :mid_channel].set(
        b1.astype(jnp.float32))
    w2p = jnp.zeros((mid_p, out_p), jnp.bfloat16).at[:mid_channel, :out_channel].set(
        w2.astype(jnp.bfloat16))
    b2p = jnp.zeros((1, out_p), jnp.float32).at[:, :out_channel].set(
        b2.astype(jnp.float32))

    # Weights/biases must fit VMEM-resident (single-buffered) under the budget.
    resident = 2 * (in_p * mid_p + mid_p * out_p) + 4 * (mid_p + out_p)
    if resident > budget - (4 << 20):
        # TODO(synk): add a mid/out-tiled weight path (extra "arbitrary" grid axes
        # with an f32 accumulator scratch) for channel counts whose bf16 weights
        # exceed the per-core VMEM budget (mainly v7x's 64 MiB).
        raise NotImplementedError("EMCINT weights too large for VMEM-resident path")

    return dict(w1=w1p, b1=b1p, w2=w2p, b2=b2p,
                dims=(in_channel, mid_channel, out_channel),
                padded=(in_p, mid_p, out_p),
                budget=budget, mxu_gran=mxu_gran, num_tc=num_tc)


def _pick_batch_tile(B, in_p, mid_p, out_p, out_bytes, budget, mxu_gran, num_tc):
    """Pick (TM, B_pad) with B_pad = grid * TM, tiles balanced over the grid."""
    # Resident operands, single-buffered via pl.Buffered(1): bf16 weights + f32 biases.
    resident = 2 * (in_p * mid_p + mid_p * out_p) + 4 * (mid_p + out_p)
    # Per batch row: double-buffered bf16 x tile + double-buffered out tile, plus
    # the f32 hidden activation and its bf16 recast (Mosaic temporaries).
    per_row = 2 * (2 * in_p) + 2 * (out_bytes * out_p) + (4 + 2) * mid_p
    avail = max(budget - (2 << 20) - resident, 16 * per_row)
    tm_max = max(16, min(1024, (avail // per_row) // 16 * 16))

    b16 = _round_up(B, 16)                 # bf16 sublane granularity only
    # Keep both v7x TensorCores busy (parallel batch axis) when B is large enough.
    n_min = num_tc if b16 >= num_tc * max(mxu_gran, 128) else 1
    n = max(n_min, _ceil_div(b16, tm_max))
    tm = _round_up(_ceil_div(b16, n), 16)
    # Align TM to the MXU M width only when the extra batch padding is small.
    if tm >= mxu_gran:
        tm_aligned = _round_up(tm, mxu_gran)
        if tm_aligned <= tm_max and n * tm_aligned - b16 <= max(32, b16 // 8):
            tm = tm_aligned
    return tm, n * tm


def emcint_forward(params, x, out_dtype=jnp.float32):
    """x: [B, in_channel] (float). Returns [B, out_channel] in out_dtype.

    out_dtype=jnp.bfloat16 halves output HBM writeback when the consumer does
    not need f32; the default keeps the module's f32 output semantics.
    """
    B = x.shape[0]
    in_channel, mid_channel, out_channel = params["dims"]
    in_p, mid_p, out_p = params["padded"]
    out_bytes = jnp.dtype(out_dtype).itemsize

    tm, b_p = _pick_batch_tile(B, in_p, mid_p, out_p, out_bytes,
                               params["budget"], params["mxu_gran"],
                               params["num_tc"])

    xp = jnp.zeros((b_p, in_p), jnp.bfloat16).at[:B, :in_channel].set(
        x.astype(jnp.bfloat16))

    cost = pl.CostEstimate(
        flops=2 * b_p * (in_p * mid_p + mid_p * out_p),
        transcendentals=0,
        bytes_accessed=(xp.size * 2
                        + params["w1"].size * 2 + params["w2"].size * 2
                        + params["b1"].size * 4 + params["b2"].size * 4
                        + b_p * out_p * out_bytes),
    )

    def call(single_buffer_weights):
        wkw = {"pipeline_mode": pl.Buffered(1)} if single_buffer_weights else {}
        return pl.pallas_call(
            emcint_kernel,
            out_shape=jax.ShapeDtypeStruct((b_p, out_p), out_dtype),
            grid_spec=pl.GridSpec(
                grid=(b_p // tm,),
                in_specs=[
                    pl.BlockSpec((tm, in_p), lambda i: (i, 0)),             # x: batch-tiled
                    pl.BlockSpec((in_p, mid_p), lambda i: (0, 0), **wkw),   # W1: resident
                    pl.BlockSpec((1, mid_p), lambda i: (0, 0), **wkw),      # b1: resident
                    pl.BlockSpec((mid_p, out_p), lambda i: (0, 0), **wkw),  # W2: resident
                    pl.BlockSpec((1, out_p), lambda i: (0, 0), **wkw),      # b2: resident
                ],
                out_specs=pl.BlockSpec((tm, out_p), lambda i: (i, 0)),
            ),
            compiler_params=pltpu.CompilerParams(
                dimension_semantics=("parallel",),
                vmem_limit_bytes=params["budget"],
            ),
            cost_estimate=cost,
        )(xp, params["w1"], params["b1"], params["w2"], params["b2"])

    try:
        out = call(True)       # single-buffer the constant-index weight blocks
    except Exception:
        out = call(False)      # fallback if pl.Buffered(1) is rejected by this JAX
    return out[:B, :out_channel]


def init_params(key, in_channel, mid_channel, out_channel):
    """Deterministic synthetic init mimicking nn.Linear's uniform(-1/sqrt(fan_in), ...)."""
    k1, k2, k3, k4 = jax.random.split(key, 4)
    bound1 = 1.0 / jnp.sqrt(in_channel)
    bound2 = 1.0 / jnp.sqrt(mid_channel)
    w1 = jax.random.uniform(k1, (in_channel, mid_channel), jnp.float32, -bound1, bound1)
    b1 = jax.random.uniform(k2, (1, mid_channel), jnp.float32, -bound1, bound1)
    w2 = jax.random.uniform(k3, (mid_channel, out_channel), jnp.float32, -bound2, bound2)
    b2 = jax.random.uniform(k4, (1, out_channel), jnp.float32, -bound2, bound2)
    return w1, b1, w2, b2


if __name__ == "__main__":
    # Small shapes consistent with the module: param = {'in_channel': 32,
    # 'mid_channel': 64, 'out_channel': 16}, batch = 8.
    # NOTE: at these toy sizes the pallas_call is pure launch overhead; in a real
    # model this MLP should be fused into the producer of x or left to XLA.
    B, in_channel, mid_channel, out_channel = 8, 32, 64, 16

    key = jax.random.PRNGKey(0)
    kx, kp = jax.random.split(key)
    x = jax.random.normal(kx, (B, in_channel), dtype=jnp.float32)
    w1, b1, w2, b2 = init_params(kp, in_channel, mid_channel, out_channel)

    params = emcint_prepare(w1, b1, w2, b2)    # one-time weight pack (cache & reuse)
    out = emcint_forward(params, x)            # default f32 output (module semantics)
    out = jax.block_until_ready(out)
    assert out.shape == (B, out_channel)
    assert out.dtype == jnp.float32

    # Reference mirroring the kernel's bf16-operand / f32-accumulate numerics.
    xb = x.astype(jnp.bfloat16).astype(jnp.float32)
    w1b = w1.astype(jnp.bfloat16).astype(jnp.float32)
    w2b = w2.astype(jnp.bfloat16).astype(jnp.float32)
    h_ref = jnp.maximum(xb @ w1b + b1, 0.0)
    h_ref = h_ref.astype(jnp.bfloat16).astype(jnp.float32)
    ref = jnp.maximum(h_ref @ w2b + b2, 0.0)
    assert jnp.allclose(out, ref, atol=1e-4, rtol=1e-4)

    # Loose sanity check against the full-precision PyTorch-equivalent forward.
    ref_full = jnp.maximum(jnp.maximum(x @ w1 + b1, 0.0) @ w2 + b2, 0.0)
    assert jnp.allclose(out, ref_full, atol=5e-2, rtol=5e-2)

    print("KERNEL_OK")
</pallas_src>

<mosaic_0001>
module attributes {stable_mosaic.version = 11 : i64} {
  func.func @emcint_kernel(%arg0: i32, %arg1: memref<16x32xbf16, #tpu.memory_space<vmem>>, %arg2: memref<32x128xbf16, #tpu.memory_space<vmem>>, %arg3: memref<1x128xf32, #tpu.memory_space<vmem>>, %arg4: memref<128x128xbf16, #tpu.memory_space<vmem>>, %arg5: memref<1x128xf32, #tpu.memory_space<vmem>>, %arg6: memref<16x128xf32, #tpu.memory_space<vmem>>) attributes {dimension_semantics = [#tpu.dimension_semantics<parallel>], iteration_bounds = array<i64: 1>, scalar_prefetch = 0 : i64, scratch_operands = 0 : i64, tpu.core_type = #tpu.core_type<tc>, window_params = [{transform_indices = @transform_0, window_bounds = array<i64: 16, 32>}, {pipeline_mode = #tpu.pipeline_mode<synchronous>, transform_indices = @transform_1, window_bounds = array<i64: 32, 128>}, {pipeline_mode = #tpu.pipeline_mode<synchronous>, transform_indices = @transform_2, window_bounds = array<i64: 1, 128>}, {pipeline_mode = #tpu.pipeline_mode<synchronous>, transform_indices = @transform_3, window_bounds = array<i64: 128, 128>}, {pipeline_mode = #tpu.pipeline_mode<synchronous>, transform_indices = @transform_4, window_bounds = array<i64: 1, 128>}, {transform_indices = @transform_5, window_bounds = array<i64: 16, 128>}]} {
    %c0 = arith.constant 0 : index
    %c0_0 = arith.constant 0 : index
    %0 = vector.load %arg1[%c0, %c0_0] : memref<16x32xbf16, #tpu.memory_space<vmem>>, vector<16x32xbf16>
    %c0_1 = arith.constant 0 : index
    %c0_2 = arith.constant 0 : index
    %1 = vector.load %arg2[%c0_1, %c0_2] : memref<32x128xbf16, #tpu.memory_space<vmem>>, vector<32x128xbf16>
    %cst = arith.constant dense<0.000000e+00> : vector<16x128xf32>
    %2 = tpu.matmul %0, %1, %cst {dimension_numbers = #tpu.dot_dimension_numbers<[1], [0], [0], [1], [0, 0, 1, 1], [], []>} : vector<16x32xbf16>, vector<32x128xbf16>, vector<16x128xf32> -> vector<16x128xf32>
    %c0_3 = arith.constant 0 : index
    %c0_4 = arith.constant 0 : index
    %3 = vector.load %arg3[%c0_3, %c0_4] : memref<1x128xf32, #tpu.memory_space<vmem>>, vector<1x128xf32>
    %4 = vector.broadcast %3 : vector<1x128xf32> to vector<16x128xf32>
    %5 = arith.addf %2, %4 : vector<16x128xf32>
    %cst_5 = arith.constant 0.000000e+00 : f32
    %6 = vector.broadcast %cst_5 : f32 to vector<16x128xf32>
    %7 = arith.maximumf %5, %6 : vector<16x128xf32>
    %8 = arith.truncf %7 : vector<16x128xf32> to vector<16x128xbf16>
    %c0_6 = arith.constant 0 : index
    %c0_7 = arith.constant 0 : index
    %9 = vector.load %arg4[%c0_6, %c0_7] : memref<128x128xbf16, #tpu.memory_space<vmem>>, vector<128x128xbf16>
    %cst_8 = arith.constant dense<0.000000e+00> : vector<16x128xf32>
    %10 = tpu.matmul %8, %9, %cst_8 {dimension_numbers = #tpu.dot_dimension_numbers<[1], [0], [0], [1], [0, 0, 1, 1], [], []>} : vector<16x128xbf16>, vector<128x128xbf16>, vector<16x128xf32> -> vector<16x128xf32>
    %c0_9 = arith.constant 0 : index
    %c0_10 = arith.constant 0 : index
    %11 = vector.load %arg5[%c0_9, %c0_10] : memref<1x128xf32, #tpu.memory_space<vmem>>, vector<1x128xf32>
    %12 = vector.broadcast %11 : vector<1x128xf32> to vector<16x128xf32>
    %13 = arith.addf %10, %12 : vector<16x128xf32>
    %cst_11 = arith.constant 0.000000e+00 : f32
    %14 = vector.broadcast %cst_11 : f32 to vector<16x128xf32>
    %15 = arith.maximumf %13, %14 : vector<16x128xf32>
    %c0_12 = arith.constant 0 : index
    %c0_13 = arith.constant 0 : index
    %16 = vector.load %arg6[%c0_12, %c0_13] : memref<16x128xf32, #tpu.memory_space<vmem>>, vector<16x128xf32>
    tpu.vector_store %arg6[%c0_12, %c0_13], %15 {strides = array<i32>} : memref<16x128xf32, #tpu.memory_space<vmem>>, vector<16x128xf32>,
    return
  }
  func.func @transform_0(%arg0: i32) -> (i32, i32) {
    %c0_i32 = arith.constant 0 : i32
    %c0_i32_0 = arith.constant 0 : i32
    return %arg0, %c0_i32 : i32, i32
  }
  func.func @transform_1(%arg0: i32) -> (i32, i32) {
    %c0_i32 = arith.constant 0 : i32
    %c0_i32_0 = arith.constant 0 : i32
    %c0_i32_1 = arith.constant 0 : i32
    return %c0_i32, %c0_i32_0 : i32, i32
  }
  func.func @transform_2(%arg0: i32) -> (i32, i32) {
    %c0_i32 = arith.constant 0 : i32
    %c0_i32_0 = arith.constant 0 : i32
    %c0_i32_1 = arith.constant 0 : i32
    return %c0_i32, %c0_i32_0 : i32, i32
  }
  func.func @transform_3(%arg0: i32) -> (i32, i32) {
    %c0_i32 = arith.constant 0 : i32
    %c0_i32_0 = arith.constant 0 : i32
    %c0_i32_1 = arith.constant 0 : i32
    return %c0_i32, %c0_i32_0 : i32, i32
  }
  func.func @transform_4(%arg0: i32) -> (i32, i32) {
    %c0_i32 = arith.constant 0 : i32
    %c0_i32_0 = arith.constant 0 : i32
    %c0_i32_1 = arith.constant 0 : i32
    return %c0_i32, %c0_i32_0 : i32, i32
  }
  func.func @transform_5(%arg0: i32) -> (i32, i32) {
    %c0_i32 = arith.constant 0 : i32
    %c0_i32_0 = arith.constant 0 : i32
    return %arg0, %c0_i32 : i32, i32
  }
}

module attributes {stable_mosaic.version = 11 : i64} {
  func.func @emcint_kernel(%arg0: i32, %arg1: memref<16x32xbf16, #tpu.memory_space<vmem>>, %arg2: memref<32x128xbf16, #tpu.memory_space<vmem>>, %arg3: memref<1x128xf32, #tpu.memory_space<vmem>>, %arg4: memref<128x128xbf16, #tpu.memory_space<vmem>>, %arg5: memref<1x128xf32, #tpu.memory_space<vmem>>, %arg6: memref<16x128xf32, #tpu.memory_space<vmem>>) attributes {dimension_semantics = [#tpu.dimension_semantics<parallel>], iteration_bounds = array<i64: 1>, scalar_prefetch = 0 : i64, scratch_operands = 0 : i64, tpu.core_type = #tpu.core_type<tc>, window_params = [{transform_indices = @transform_0, window_bounds = array<i64: 16, 32>}, {pipeline_mode = #tpu.pipeline_mode<synchronous>, transform_indices = @transform_1, window_bounds = array<i64: 32, 128>}, {pipeline_mode = #tpu.pipeline_mode<synchronous>, transform_indices = @transform_2, window_bounds = array<i64: 1, 128>}, {pipeline_mode = #tpu.pipeline_mode<synchronous>, transform_indices = @transform_3, window_bounds = array<i64: 128, 128>}, {pipeline_mode = #tpu.pipeline_mode<synchronous>, transform_indices = @transform_4, window_bounds = array<i64: 1, 128>}, {transform_indices = @transform_5, window_bounds = array<i64: 16, 128>}]} {
    %c0 = arith.constant 0 : index
    %c0_0 = arith.constant 0 : index
    %0 = vector.load %arg1[%c0, %c0_0] : memref<16x32xbf16, #tpu.memory_space<vmem>>, vector<16x32xbf16>
    %c0_1 = arith.constant 0 : index
    %c0_2 = arith.constant 0 : index
    %1 = vector.load %arg2[%c0_1, %c0_2] : memref<32x128xbf16, #tpu.memory_space<vmem>>, vector<32x128xbf16>
    %cst = arith.constant dense<0.000000e+00> : vector<16x128xf32>
    %2 = tpu.matmul %0, %1, %cst {dimension_numbers = #tpu.dot_dimension_numbers<[1], [0], [0], [1], [0, 0, 1, 1], [], []>} : vector<16x32xbf16>, vector<32x128xbf16>, vector<16x128xf32> -> vector<16x128xf32>
    %c0_3 = arith.constant 0 : index
    %c0_4 = arith.constant 0 : index
    %3 = vector.load %arg3[%c0_3, %c0_4] : memref<1x128xf32, #tpu.memory_space<vmem>>, vector<1x128xf32>
    %4 = vector.broadcast %3 : vector<1x128xf32> to vector<16x128xf32>
    %5 = arith.addf %2, %4 : vector<16x128xf32>
    %cst_5 = arith.constant 0.000000e+00 : f32
    %6 = vector.broadcast %cst_5 : f32 to vector<16x128xf32>
    %7 = arith.maximumf %5, %6 : vector<16x128xf32>
    %8 = arith.truncf %7 : vector<16x128xf32> to vector<16x128xbf16>
    %c0_6 = arith.constant 0 : index
    %c0_7 = arith.constant 0 : index
    %9 = vector.load %arg4[%c0_6, %c0_7] : memref<128x128xbf16, #tpu.memory_space<vmem>>, vector<128x128xbf16>
    %cst_8 = arith.constant dense<0.000000e+00> : vector<16x128xf32>
    %10 = tpu.matmul %8, %9, %cst_8 {dimension_numbers = #tpu.dot_dimension_numbers<[1], [0], [0], [1], [0, 0, 1, 1], [], []>} : vector<16x128xbf16>, vector<128x128xbf16>, vector<16x128xf32> -> vector<16x128xf32>
    %c0_9 = arith.constant 0 : index
    %c0_10 = arith.constant 0 : index
    %11 = vector.load %arg5[%c0_9, %c0_10] : memref<1x128xf32, #tpu.memory_space<vmem>>, vector<1x128xf32>
    %12 = vector.broadcast %11 : vector<1x128xf32> to vector<16x128xf32>
    %13 = arith.addf %10, %12 : vector<16x128xf32>
    %cst_11 = arith.constant 0.000000e+00 : f32
    %14 = vector.broadcast %cst_11 : f32 to vector<16x128xf32>
    %15 = arith.maximumf %13, %14 : vector<16x128xf32>
    %c0_12 = arith.constant 0 : index
    %c0_13 = arith.constant 0 : index
    %16 = vector.load %arg6[%c0_12, %c0_13] : memref<16x128xf32, #tpu.memory_space<vmem>>, vector<16x128xf32>
    tpu.vector_store %arg6[%c0_12, %c0_13], %15 {strides = array<i32>} : memref<16x128xf32, #tpu.memory_space<vmem>>, vector<16x128xf32>,
    return
  }
  func.func @transform_0(%arg0: i32) -> (i32, i32) {
    %c0_i32 = arith.constant 0 : i32
    %c0_i32_0 = arith.constant 0 : i32
    return %arg0, %c0_i32 : i32, i32
  }
  func.func @transform_1(%arg0: i32) -> (i32, i32) {
    %c0_i32 = arith.constant 0 : i32
    %c0_i32_0 = arith.constant 0 : i32
    %c0_i32_1 = arith.constant 0 : i32
    return %c0_i32, %c0_i32_0 : i32, i32
  }
  func.func @transform_2(%arg0: i32) -> (i32, i32) {
    %c0_i32 = arith.constant 0 : i32
    %c0_i32_0 = arith.constant 0 : i32
    %c0_i32_1 = arith.constant 0 : i32
    return %c0_i32, %c0_i32_0 : i32, i32
  }
  func.func @transform_3(%arg0: i32) -> (i32, i32) {
    %c0_i32 = arith.constant 0 : i32
    %c0_i32_0 = arith.constant 0 : i32
    %c0_i32_1 = arith.constant 0 : i32
    return %c0_i32, %c0_i32_0 : i32, i32
  }
  func.func @transform_4(%arg0: i32) -> (i32, i32) {
    %c0_i32 = arith.constant 0 : i32
    %c0_i32_0 = arith.constant 0 : i32
    %c0_i32_1 = arith.constant 0 : i32
    return %c0_i32, %c0_i32_0 : i32, i32
  }
  func.func @transform_5(%arg0: i32) -> (i32, i32) {
    %c0_i32 = arith.constant 0 : i32
    %c0_i32_0 = arith.constant 0 : i32
    return %arg0, %c0_i32 : i32, i32
  }
}

</mosaic_0001>

<llo_original>
// kernel: tpu_custom_call.1
$region0: #{tpu_custom_call.1}
  #allocation0 [shape = 'u32[]', space=smem, size = 0x4, offset = 0x4, fixed_abs, tag = 'smem constant byte address 0x4 - core index']
  #allocation1 [shape = 'u32[144,128]{1,0:T(1,128)}', space=vmem, size = 0x12000, scoped, tag = 'internal scratch']
  %s0 = inlined_call_operand.hbm [shape: bf16[16,32], index: 0, kind: input, shape index: {}]
  %s1 = inlined_call_operand.hbm [shape: bf16[32,128], index: 1, kind: input, shape index: {}]
  %s2 = inlined_call_operand.hbm [shape: f32[1,128], index: 2, kind: input, shape index: {}]
  %s3 = inlined_call_operand.hbm [shape: bf16[128,128], index: 3, kind: input, shape index: {}]
  %s4 = inlined_call_operand.hbm [shape: f32[1,128], index: 4, kind: input, shape index: {}]
  %s5 = inlined_call_operand.hbm [shape: f32[16,128], index: 5, kind: output, shape index: {}]
  %s6 = sld [smem:[#allocation0]]
  $region50: #{tpu_custom_call.1} parent=0
    _
  %s8 = ssub.s32 1, %s6
  %s9 = scalar_select 0, %s8, %s6
  $region1: #{tpu_custom_call.1} parent=0
    #allocation2 [shape = 'u8[4096]{0}', space=vmem, size = 0x1000, scoped, tag = 'input window, operand 0, single buffered']
    #allocation3 [shape = 's32[1]{0}', space=sflag, size = 0x4, scoped, tag = 'scoped memory for tpu_custom_call.1']
    #allocation4 [shape = 's32[1]{0}', space=sflag, size = 0x4, scoped, tag = 'scoped memory for tpu_custom_call.1']
    #allocation5 [shape = 'u8[8192]{0}', space=vmem, size = 0x2000, scoped, tag = 'input window, operand 1, single buffered']
    #allocation6 [shape = 's32[1]{0}', space=sflag, size = 0x4, scoped, tag = 'scoped memory for tpu_custom_call.1']
    #allocation7 [shape = 'u8[512]{0}', space=vmem, size = 0x400, scoped, tag = 'input window, operand 2, single buffered']
    #allocation8 [shape = 'u8[32768]{0}', space=vmem, size = 0x8000, scoped, tag = 'input window, operand 3, single buffered']
    #allocation9 [shape = 's32[1]{0}', space=sflag, size = 0x4, scoped, tag = 'scoped memory for tpu_custom_call.1']
    #allocation10 [shape = 'u8[512]{0}', space=vmem, size = 0x400, scoped, tag = 'input window, operand 4, single buffered']
    #allocation11 [shape = 'u8[8192]{0}', space=vmem, size = 0x2000, scoped, tag = 'output window, operand 0, single buffered']
    %10 = vsyncpa [#allocation3], 0
    %11 = vsyncpa [#allocation6], 0
    %12 = vsyncpa [#allocation9], 0
    %13 = vsyncpa [#allocation4], 0
    // Predicated region
    $region2: #{tpu_custom_call.1} parent=1 // pred_check
      _
    $region3: #{tpu_custom_call.1} parent=1 // pred_check_branch
      %15 = sbr.rel (0) target = $region5
    $region4: #{tpu_custom_call.1} parent=1 // pred_region
      %s17 = ssub.s32 128, 128
      %18 = vsyncadd [#allocation3], %s17
      %s19 = sshll.u32 [#allocation2], 4
      %s20 = int_to_ptr.vmem [resolvable:$true] %s19
      %25 = dma.hbm_to_vmem [thread:$0]  %s0, 128, %s20, [#allocation3], 64, 64, 4
    $region5: #{tpu_custom_call.1} parent=1 // pred_fallthru
      _
    // Predicated region
    $region6: #{tpu_custom_call.1} parent=1 // pred_check
      _
    $region7: #{tpu_custom_call.1} parent=1 // pred_check_branch
      %27 = sbr.rel (0) target = $region9
    $region8: #{tpu_custom_call.1} parent=1 // pred_region
      %s29 = ssub.s32 256, 256
      %30 = vsyncadd [#allocation6], %s29
      %s31 = sshll.u32 [#allocation5], 4
      %s32 = int_to_ptr.vmem [resolvable:$true] %s31
      %37 = dma.hbm_to_vmem [thread:$0]  %s1, 256, %s32, [#allocation6], 64, 64, 4
    $region9: #{tpu_custom_call.1} parent=1 // pred_fallthru
      _
    // Predicated region
    $region10: #{tpu_custom_call.1} parent=1 // pred_check
      _
    $region11: #{tpu_custom_call.1} parent=1 // pred_check_branch
      %39 = sbr.rel (0) target = $region13
    $region12: #{tpu_custom_call.1} parent=1 // pred_region
      %s41 = ssub.s32 16, 16
      %42 = vsyncadd [#allocation6], %s41
      %s44 = sshll.u32 [#allocation7], 4
      %s45 = int_to_ptr.vmem [resolvable:$true] %s44
      %47 = dma.hbm_to_vmem [thread:$0]  %s2, 16, %s45, [#allocation6]
    $region13: #{tpu_custom_call.1} parent=1 // pred_fallthru
      _
    // Predicated region
    $region14: #{tpu_custom_call.1} parent=1 // pred_check
      _
    $region15: #{tpu_custom_call.1} parent=1 // pred_check_branch
      %49 = sbr.rel (0) target = $region17
    $region16: #{tpu_custom_call.1} parent=1 // pred_region
      %s51 = ssub.s32 1024, 1024
      %52 = vsyncadd [#allocation9], %s51
      %s53 = sshll.u32 [#allocation8], 4
      %s54 = int_to_ptr.vmem [resolvable:$true] %s53
      %59 = dma.hbm_to_vmem [thread:$0]  %s3, 1024, %s54, [#allocation9], 64, 64, 4
    $region17: #{tpu_custom_call.1} parent=1 // pred_fallthru
      _
    // Predicated region
    $region18: #{tpu_custom_call.1} parent=1 // pred_check
      _
    $region19: #{tpu_custom_call.1} parent=1 // pred_check_branch
      %61 = sbr.rel (0) target = $region21
    $region20: #{tpu_custom_call.1} parent=1 // pred_region
      %s63 = ssub.s32 16, 16
      %64 = vsyncadd [#allocation9], %s63
      %s66 = sshll.u32 [#allocation10], 4
      %s67 = int_to_ptr.vmem [resolvable:$true] %s66
      %69 = dma.hbm_to_vmem [thread:$0]  %s4, 16, %s67, [#allocation9]
    $region21: #{tpu_custom_call.1} parent=1 // pred_fallthru
      _
    // Predicated region
    $region22: #{tpu_custom_call.1} parent=1 // pred_check
      _
    $region23: #{tpu_custom_call.1} parent=1 // pred_check_branch
      %71 = sbr.rel (0) target = $region25
    $region24: #{tpu_custom_call.1} parent=1 // pred_region
      %72 = dma.done [#allocation3], 128
    $region25: #{tpu_custom_call.1} parent=1 // pred_fallthru
      _
    // Predicated region
    $region26: #{tpu_custom_call.1} parent=1 // pred_check
      _
    $region27: #{tpu_custom_call.1} parent=1 // pred_check_branch
      %74 = sbr.rel (0) target = $region29
    $region28: #{tpu_custom_call.1} parent=1 // pred_region
      %75 = dma.done [#allocation6], 256
    $region29: #{tpu_custom_call.1} parent=1 // pred_fallthru
      _
    // Predicated region
    $region30: #{tpu_custom_call.1} parent=1 // pred_check
      _
    $region31: #{tpu_custom_call.1} parent=1 // pred_check_branch
      %77 = sbr.rel (0) target = $region33
    $region32: #{tpu_custom_call.1} parent=1 // pred_region
      %78 = dma.done [#allocation6], 16
    $region33: #{tpu_custom_call.1} parent=1 // pred_fallthru
      _
    // Predicated region
    $region34: #{tpu_custom_call.1} parent=1 // pred_check
      _
    $region35: #{tpu_custom_call.1} parent=1 // pred_check_branch
      %80 = sbr.rel (0) target = $region37
    $region36: #{tpu_custom_call.1} parent=1 // pred_region
      %81 = dma.done [#allocation9], 1024
    $region37: #{tpu_custom_call.1} parent=1 // pred_fallthru
      _
    // Predicated region
    $region38: #{tpu_custom_call.1} parent=1 // pred_check
      _
    $region39: #{tpu_custom_call.1} parent=1 // pred_check_branch
      %83 = sbr.rel (0) target = $region41
    $region40: #{tpu_custom_call.1} parent=1 // pred_region
      %84 = dma.done [#allocation9], 16
    $region41: #{tpu_custom_call.1} parent=1 // pred_fallthru
      _
    %v86 = vld [vmem:[#allocation2] sm:$0xf]
    %v87 = vld [vmem:[#allocation2 + $0x4] sm:$0xf]
    %v88 = vld [vmem:[#allocation5] sm:$0xf]
    %v89 = vld [vmem:[#allocation5 + $0x4] sm:$0xf]
    %v90 = vld [vmem:[#allocation5 + $0x8] sm:$0xf]
    %v91 = vld [vmem:[#allocation5 + $0xc] sm:$0xf]
    %v92 = vld [vmem:[#allocation7] sm:$0x1]
    %v94 = vlaneseq
    %v95 = vshrl.u32 %v94, 7
    %v96 = vsub.s32 0, %v95
    %v97 = vrot.slane %v92, %v96
    %v101 = vunpack.c.l.b16 %v86
    %v102 = vunpack.c.l.b16 %v87
    %v103 = vpack.c.b16 %v102, %v101
    %v108 = vunpack.c.l.b16 %v88
    %v109 = vunpack.c.l.b16 %v89
    %v110 = vunpack.c.l.b16 %v90
    %v111 = vunpack.c.l.b16 %v91
    %v112 = vpack.c.b16 %v109, %v108
    %v113 = vpack.c.b16 %v111, %v110
    %vm116 = vcmask 261120
    %v118 = vsel %vm116, %v103, 0
    %120 = vmatprep.subr.bf16.mxu0 0
    %121 = vmatpush1.bf16.msra.mxu0 %v112
    %122 = vmatprep.subr.bf16.mxu0 0
    %123 = vmatpush1.bf16.msra.mxu0 %v113
    %124 = vmatprep.subr.bf16.mxu0 0
    %125 = vmatpush1.bf16.msra.mxu0 0
    %126 = vmatprep.subr.bf16.mxu0 0
    %127 = vmatpush1.bf16.msra.mxu0 0
    %128 = vmatprep.subr.bf16.mxu0 0
    %129 = vmatpush1.bf16.msra.mxu0 0
    %130 = vmatprep.subr.bf16.mxu0 0
    %131 = vmatpush1.bf16.msra.mxu0 0
    %132 = vmatprep.subr.bf16.mxu0 0
    %133 = vmatpush1.bf16.msra.mxu0 0
    %134 = vmatprep.subr.bf16.mxu0 0
    %135 = vmatpush1.bf16.msra.mxu0 0
    %136 = vmatprep.subr.bf16.mxu0 0
    %137 = vmatpush1.bf16.msra.mxu0 0
    %138 = vmatprep.subr.bf16.mxu0 0
    %139 = vmatpush1.bf16.msra.mxu0 0
    %140 = vmatprep.subr.bf16.mxu0 0
    %141 = vmatpush1.bf16.msra.mxu0 0
    %142 = vmatprep.subr.bf16.mxu0 0
    %143 = vmatpush1.bf16.msra.mxu0 0
    %144 = vmatprep.subr.bf16.mxu0 0
    %145 = vmatpush1.bf16.msra.mxu0 0
    %146 = vmatprep.subr.bf16.mxu0 0
    %147 = vmatpush1.bf16.msra.mxu0 0
    %148 = vmatprep.subr.bf16.mxu0 0
    %149 = vmatpush1.bf16.msra.mxu0 0
    %150 = vmatprep.subr.bf16.mxu0 0
    %151 = vmatpush1.bf16.msra.mxu0 0
    %152 = vmatprep.mubr.bf16.mxu0 0
    %153 = vmatmul.mubr.bf16.gmra.mrb[0].mxu0 %v118
    %v154 = vpop.f32.mrb[0].mxu0
    %v155 = vadd.f32 %v97, %v154
    %v156 = vpop.f32.mrb[0].mxu0
    %v157 = vpop.f32.mrb[0].mxu0
    %v158 = vadd.f32 %v97, %v157
    %v159 = vpop.f32.mrb[0].mxu0
    %160 = vdwg.mxu0
    %v161 = vmax.f32 %v155, 0.0
    %v162 = vmax.f32 %v158, 0.0
    %v163 = vpack.c.bf16 %v162, %v161
    %v164 = vld [vmem:[#allocation8] sm:$0xf]
    %v165 = vld [vmem:[#allocation8 + $0x4] sm:$0xf]
    %v166 = vld [vmem:[#allocation8 + $0x8] sm:$0xf]
    %v167 = vld [vmem:[#allocation8 + $0xc] sm:$0xf]
    %v168 = vld [vmem:[#allocation8 + $0x10] sm:$0xf]
    %v169 = vld [vmem:[#allocation8 + $0x14] sm:$0xf]
    %v170 = vld [vmem:[#allocation8 + $0x18] sm:$0xf]
    %v171 = vld [vmem:[#allocation8 + $0x1c] sm:$0xf]
    %v172 = vld [vmem:[#allocation8 + $0x20] sm:$0xf]
    %v173 = vld [vmem:[#allocation8 + $0x24] sm:$0xf]
    %v174 = vld [vmem:[#allocation8 + $0x28] sm:$0xf]
    %v175 = vld [vmem:[#allocation8 + $0x2c] sm:$0xf]
    %v176 = vld [vmem:[#allocation8 + $0x30] sm:$0xf]
    %v177 = vld [vmem:[#allocation8 + $0x34] sm:$0xf]
    %v178 = vld [vmem:[#allocation8 + $0x38] sm:$0xf]
    %v179 = vld [vmem:[#allocation8 + $0x3c] sm:$0xf]
    %v180 = vld [vmem:[#allocation10] sm:$0x1]
    %v182 = vlaneseq
    %v183 = vshrl.u32 %v182, 7
    %v184 = vsub.s32 0, %v183
    %v185 = vrot.slane %v180, %v184
    %v203 = vunpack.c.l.b16 %v164
    %v204 = vunpack.c.l.b16 %v165
    %v205 = vunpack.c.l.b16 %v166
    %v206 = vunpack.c.l.b16 %v167
    %v207 = vunpack.c.l.b16 %v168
    %v208 = vunpack.c.l.b16 %v169
    %v209 = vunpack.c.l.b16 %v170
    %v210 = vunpack.c.l.b16 %v171
    %v211 = vunpack.c.l.b16 %v172
    %v212 = vunpack.c.l.b16 %v173
    %v213 = vunpack.c.l.b16 %v174
    %v214 = vunpack.c.l.b16 %v175
    %v215 = vunpack.c.l.b16 %v176
    %v216 = vunpack.c.l.b16 %v177
    %v217 = vunpack.c.l.b16 %v178
    %v218 = vunpack.c.l.b16 %v179
    %v219 = vpack.c.b16 %v204, %v203
    %v220 = vpack.c.b16 %v206, %v205
    %v221 = vpack.c.b16 %v208, %v207
    %v222 = vpack.c.b16 %v210, %v209
    %v223 = vpack.c.b16 %v212, %v211
    %v224 = vpack.c.b16 %v214, %v213
    %v225 = vpack.c.b16 %v216, %v215
    %v226 = vpack.c.b16 %v218, %v217
    %235 = vmatprep.subr.bf16.mxu0 0
    %236 = vmatpush1.bf16.msra.mxu0 %v219
    %237 = vmatprep.subr.bf16.mxu0 0
    %238 = vmatpush1.bf16.msra.mxu0 %v220
    %239 = vmatprep.subr.bf16.mxu0 0
    %240 = vmatpush1.bf16.msra.mxu0 %v221
    %241 = vmatprep.subr.bf16.mxu0 0
    %242 = vmatpush1.bf16.msra.mxu0 %v222
    %243 = vmatprep.subr.bf16.mxu0 0
    %244 = vmatpush1.bf16.msra.mxu0 %v223
    %245 = vmatprep.subr.bf16.mxu0 0
    %246 = vmatpush1.bf16.msra.mxu0 %v224
    %247 = vmatprep.subr.bf16.mxu0 0
    %248 = vmatpush1.bf16.msra.mxu0 %v225
    %249 = vmatprep.subr.bf16.mxu0 0
    %250 = vmatpush1.bf16.msra.mxu0 %v226
    %251 = vmatprep.subr.bf16.mxu0 0
    %252 = vmatpush1.bf16.msra.mxu0 0
    %253 = vmatprep.subr.bf16.mxu0 0
    %254 = vmatpush1.bf16.msra.mxu0 0
    %255 = vmatprep.subr.bf16.mxu0 0
    %256 = vmatpush1.bf16.msra.mxu0 0
    %257 = vmatprep.subr.bf16.mxu0 0
    %258 = vmatpush1.bf16.msra.mxu0 0
    %259 = vmatprep.subr.bf16.mxu0 0
    %260 = vmatpush1.bf16.msra.mxu0 0
    %261 = vmatprep.subr.bf16.mxu0 0
    %262 = vmatpush1.bf16.msra.mxu0 0
    %263 = vmatprep.subr.bf16.mxu0 0
    %264 = vmatpush1.bf16.msra.mxu0 0
    %265 = vmatprep.subr.bf16.mxu0 0
    %266 = vmatpush1.bf16.msra.mxu0 0
    %267 = vmatprep.mubr.bf16.mxu0 0
    %268 = vmatmul.mubr.bf16.gmra.mrb[0].mxu0 %v163
    %v269 = vpop.f32.mrb[0].mxu0
    %v270 = vadd.f32 %v185, %v269
    %v271 = vpop.f32.mrb[0].mxu0
    %v272 = vpop.f32.mrb[0].mxu0
    %v273 = vadd.f32 %v185, %v272
    %v274 = vpop.f32.mrb[0].mxu0
    %275 = vdwg.mxu0
    %v276 = vmax.f32 %v270, 0.0
    %v277 = vmax.f32 %v273, 0.0
    %278 = vst [vmem:[#allocation11] sm:$0xff] %v276
    %279 = vst [vmem:[#allocation11 + $0x8] sm:$0xff] %v277
    // Predicated region
    $region42: #{tpu_custom_call.1} parent=1 // pred_check
      _
    $region43: #{tpu_custom_call.1} parent=1 // pred_check_branch
      %281 = sbr.rel (0) target = $region45
    $region44: #{tpu_custom_call.1} parent=1 // pred_region
      %s283 = ssub.s32 256, 256
      %284 = vsyncadd [#allocation4], %s283
      %s285 = sshll.u32 [#allocation11], 4
      %s286 = int_to_ptr.vmem [resolvable:$true] %s285
      %291 = dma.vmem_to_hbm [thread:$0]  %s286, 256, %s5, [#allocation4], 128, 128, 8
    $region45: #{tpu_custom_call.1} parent=1 // pred_fallthru
      _
    // Predicated region
    $region46: #{tpu_custom_call.1} parent=1 // pred_check
      _
    $region47: #{tpu_custom_call.1} parent=1 // pred_check_branch
      %293 = sbr.rel (0) target = $region49
    $region48: #{tpu_custom_call.1} parent=1 // pred_region
      %294 = dma.done [#allocation4], 256
    $region49: #{tpu_custom_call.1} parent=1 // pred_fallthru
      _
    %295 = vsyncpa [#allocation3], 1
    %296 = vsyncpa [#allocation6], 1
    %297 = vsyncpa [#allocation9], 1
    %298 = vsyncpa [#allocation4], 1

// kernel: tpu_custom_call.1
$region0: #{tpu_custom_call.1}
  #allocation0 [shape = 'u32[]', space=smem, size = 0x4, offset = 0x4, fixed_abs, tag = 'smem constant byte address 0x4 - core index']
  #allocation1 [shape = 'u32[144,128]{1,0:T(1,128)}', space=vmem, size = 0x12000, scoped, tag = 'internal scratch']
  %s0 = inlined_call_operand.hbm [shape: bf16[16,32], index: 0, kind: input, shape index: {}]
  %s1 = inlined_call_operand.hbm [shape: bf16[32,128], index: 1, kind: input, shape index: {}]
  %s2 = inlined_call_operand.hbm [shape: f32[1,128], index: 2, kind: input, shape index: {}]
  %s3 = inlined_call_operand.hbm [shape: bf16[128,128], index: 3, kind: input, shape index: {}]
  %s4 = inlined_call_operand.hbm [shape: f32[1,128], index: 4, kind: input, shape index: {}]
  %s5 = inlined_call_operand.hbm [shape: f32[16,128], index: 5, kind: output, shape index: {}]
  %s6 = sld [smem:[#allocation0]]
  $region50: #{tpu_custom_call.1} parent=0
    _
  %s8 = ssub.s32 1, %s6
  %s9 = scalar_select 0, %s8, %s6
  $region1: #{tpu_custom_call.1} parent=0
    #allocation2 [shape = 'u8[4096]{0}', space=vmem, size = 0x1000, scoped, tag = 'input window, operand 0, single buffered']
    #allocation3 [shape = 's32[1]{0}', space=sflag, size = 0x4, scoped, tag = 'scoped memory for tpu_custom_call.1']
    #allocation4 [shape = 's32[1]{0}', space=sflag, size = 0x4, scoped, tag = 'scoped memory for tpu_custom_call.1']
    #allocation5 [shape = 'u8[8192]{0}', space=vmem, size = 0x2000, scoped, tag = 'input window, operand 1, single buffered']
    #allocation6 [shape = 's32[1]{0}', space=sflag, size = 0x4, scoped, tag = 'scoped memory for tpu_custom_call.1']
    #allocation7 [shape = 'u8[512]{0}', space=vmem, size = 0x400, scoped, tag = 'input window, operand 2, single buffered']
    #allocation8 [shape = 'u8[32768]{0}', space=vmem, size = 0x8000, scoped, tag = 'input window, operand 3, single buffered']
    #allocation9 [shape = 's32[1]{0}', space=sflag, size = 0x4, scoped, tag = 'scoped memory for tpu_custom_call.1']
    #allocation10 [shape = 'u8[512]{0}', space=vmem, size = 0x400, scoped, tag = 'input window, operand 4, single buffered']
    #allocation11 [shape = 'u8[8192]{0}', space=vmem, size = 0x2000, scoped, tag = 'output window, operand 0, single buffered']
    %10 = vsyncpa [#allocation3], 0
    %11 = vsyncpa [#allocation6], 0
    %12 = vsyncpa [#allocation9], 0
    %13 = vsyncpa [#allocation4], 0
    // Predicated region
    $region2: #{tpu_custom_call.1} parent=1 // pred_check
      _
    $region3: #{tpu_custom_call.1} parent=1 // pred_check_branch
      %15 = sbr.rel (0) target = $region5
    $region4: #{tpu_custom_call.1} parent=1 // pred_region
      %s17 = ssub.s32 128, 128
      %18 = vsyncadd [#allocation3], %s17
      %s19 = sshll.u32 [#allocation2], 4
      %s20 = int_to_ptr.vmem [resolvable:$true] %s19
      %25 = dma.hbm_to_vmem [thread:$0]  %s0, 128, %s20, [#allocation3], 64, 64, 4
    $region5: #{tpu_custom_call.1} parent=1 // pred_fallthru
      _
    // Predicated region
    $region6: #{tpu_custom_call.1} parent=1 // pred_check
      _
    $region7: #{tpu_custom_call.1} parent=1 // pred_check_branch
      %27 = sbr.rel (0) target = $region9
    $region8: #{tpu_custom_call.1} parent=1 // pred_region
      %s29 = ssub.s32 256, 256
      %30 = vsyncadd [#allocation6], %s29
      %s31 = sshll.u32 [#allocation5], 4
      %s32 = int_to_ptr.vmem [resolvable:$true] %s31
      %37 = dma.hbm_to_vmem [thread:$0]  %s1, 256, %s32, [#allocation6], 64, 64, 4
    $region9: #{tpu_custom_call.1} parent=1 // pred_fallthru
      _
    // Predicated region
    $region10: #{tpu_custom_call.1} parent=1 // pred_check
      _
    $region11: #{tpu_custom_call.1} parent=1 // pred_check_branch
      %39 = sbr.rel (0) target = $region13
    $region12: #{tpu_custom_call.1} parent=1 // pred_region
      %s41 = ssub.s32 16, 16
      %42 = vsyncadd [#allocation6], %s41
      %s44 = sshll.u32 [#allocation7], 4
      %s45 = int_to_ptr.vmem [resolvable:$true] %s44
      %47 = dma.hbm_to_vmem [thread:$0]  %s2, 16, %s45, [#allocation6]
    $region13: #{tpu_custom_call.1} parent=1 // pred_fallthru
      _
    // Predicated region
    $region14: #{tpu_custom_call.1} parent=1 // pred_check
      _
    $region15: #{tpu_custom_call.1} parent=1 // pred_check_branch
      %49 = sbr.rel (0) target = $region17
    $region16: #{tpu_custom_call.1} parent=1 // pred_region
      %s51 = ssub.s32 1024, 1024
      %52 = vsyncadd [#allocation9], %s51
      %s53 = sshll.u32 [#allocation8], 4
      %s54 = int_to_ptr.vmem [resolvable:$true] %s53
      %59 = dma.hbm_to_vmem [thread:$0]  %s3, 1024, %s54, [#allocation9], 64, 64, 4
    $region17: #{tpu_custom_call.1} parent=1 // pred_fallthru
      _
    // Predicated region
    $region18: #{tpu_custom_call.1} parent=1 // pred_check
      _
    $region19: #{tpu_custom_call.1} parent=1 // pred_check_branch
      %61 = sbr.rel (0) target = $region21
    $region20: #{tpu_custom_call.1} parent=1 // pred_region
      %s63 = ssub.s32 16, 16
      %64 = vsyncadd [#allocation9], %s63
      %s66 = sshll.u32 [#allocation10], 4
      %s67 = int_to_ptr.vmem [resolvable:$true] %s66
      %69 = dma.hbm_to_vmem [thread:$0]  %s4, 16, %s67, [#allocation9]
    $region21: #{tpu_custom_call.1} parent=1 // pred_fallthru
      _
    // Predicated region
    $region22: #{tpu_custom_call.1} parent=1 // pred_check
      _
    $region23: #{tpu_custom_call.1} parent=1 // pred_check_branch
      %71 = sbr.rel (0) target = $region25
    $region24: #{tpu_custom_call.1} parent=1 // pred_region
      %72 = dma.done [#allocation3], 128
    $region25: #{tpu_custom_call.1} parent=1 // pred_fallthru
      _
    // Predicated region
    $region26: #{tpu_custom_call.1} parent=1 // pred_check
      _
    $region27: #{tpu_custom_call.1} parent=1 // pred_check_branch
      %74 = sbr.rel (0) target = $region29
    $region28: #{tpu_custom_call.1} parent=1 // pred_region
      %75 = dma.done [#allocation6], 256
    $region29: #{tpu_custom_call.1} parent=1 // pred_fallthru
      _
    // Predicated region
    $region30: #{tpu_custom_call.1} parent=1 // pred_check
      _
    $region31: #{tpu_custom_call.1} parent=1 // pred_check_branch
      %77 = sbr.rel (0) target = $region33
    $region32: #{tpu_custom_call.1} parent=1 // pred_region
      %78 = dma.done [#allocation6], 16
    $region33: #{tpu_custom_call.1} parent=1 // pred_fallthru
      _
    // Predicated region
    $region34: #{tpu_custom_call.1} parent=1 // pred_check
      _
    $region35: #{tpu_custom_call.1} parent=1 // pred_check_branch
      %80 = sbr.rel (0) target = $region37
    $region36: #{tpu_custom_call.1} parent=1 // pred_region
      %81 = dma.done [#allocation9], 1024
    $region37: #{tpu_custom_call.1} parent=1 // pred_fallthru
      _
    // Predicated region
    $region38: #{tpu_custom_call.1} parent=1 // pred_check
      _
    $region39: #{tpu_custom_call.1} parent=1 // pred_check_branch
      %83 = sbr.rel (0) target = $region41
    $region40: #{tpu_custom_call.1} parent=1 // pred_region
      %84 = dma.done [#allocation9], 16
    $region41: #{tpu_custom_call.1} parent=1 // pred_fallthru
      _
    %v86 = vld [vmem:[#allocation2] sm:$0xf]
    %v87 = vld [vmem:[#allocation2 + $0x4] sm:$0xf]
    %v88 = vld [vmem:[#allocation5] sm:$0xf]
    %v89 = vld [vmem:[#allocation5 + $0x4] sm:$0xf]
    %v90 = vld [vmem:[#allocation5 + $0x8] sm:$0xf]
    %v91 = vld [vmem:[#allocation5 + $0xc] sm:$0xf]
    %v92 = vld [vmem:[#allocation7] sm:$0x1]
    %v94 = vlaneseq
    %v95 = vshrl.u32 %v94, 7
    %v96 = vsub.s32 0, %v95
    %v97 = vrot.slane %v92, %v96
    %v101 = vunpack.c.l.b16 %v86
    %v102 = vunpack.c.l.b16 %v87
    %v103 = vpack.c.b16 %v102, %v101
    %v108 = vunpack.c.l.b16 %v88
    %v109 = vunpack.c.l.b16 %v89
    %v110 = vunpack.c.l.b16 %v90
    %v111 = vunpack.c.l.b16 %v91
    %v112 = vpack.c.b16 %v109, %v108
    %v113 = vpack.c.b16 %v111, %v110
    %vm116 = vcmask 261120
    %v118 = vsel %vm116, %v103, 0
    %120 = vmatprep.subr.bf16.mxu0 0
    %121 = vmatpush1.bf16.msra.mxu0 %v112
    %122 = vmatprep.subr.bf16.mxu0 0
    %123 = vmatpush1.bf16.msra.mxu0 %v113
    %124 = vmatprep.subr.bf16.mxu0 0
    %125 = vmatpush1.bf16.msra.mxu0 0
    %126 = vmatprep.subr.bf16.mxu0 0
    %127 = vmatpush1.bf16.msra.mxu0 0
    %128 = vmatprep.subr.bf16.mxu0 0
    %129 = vmatpush1.bf16.msra.mxu0 0
    %130 = vmatprep.subr.bf16.mxu0 0
    %131 = vmatpush1.bf16.msra.mxu0 0
    %132 = vmatprep.subr.bf16.mxu0 0
    %133 = vmatpush1.bf16.msra.mxu0 0
    %134 = vmatprep.subr.bf16.mxu0 0
    %135 = vmatpush1.bf16.msra.mxu0 0
    %136 = vmatprep.subr.bf16.mxu0 0
    %137 = vmatpush1.bf16.msra.mxu0 0
    %138 = vmatprep.subr.bf16.mxu0 0
    %139 = vmatpush1.bf16.msra.mxu0 0
    %140 = vmatprep.subr.bf16.mxu0 0
    %141 = vmatpush1.bf16.msra.mxu0 0
    %142 = vmatprep.subr.bf16.mxu0 0
    %143 = vmatpush1.bf16.msra.mxu0 0
    %144 = vmatprep.subr.bf16.mxu0 0
    %145 = vmatpush1.bf16.msra.mxu0 0
    %146 = vmatprep.subr.bf16.mxu0 0
    %147 = vmatpush1.bf16.msra.mxu0 0
    %148 = vmatprep.subr.bf16.mxu0 0
    %149 = vmatpush1.bf16.msra.mxu0 0
    %150 = vmatprep.subr.bf16.mxu0 0
    %151 = vmatpush1.bf16.msra.mxu0 0
    %152 = vmatprep.mubr.bf16.mxu0 0
    %153 = vmatmul.mubr.bf16.gmra.mrb[0].mxu0 %v118
    %v154 = vpop.f32.mrb[0].mxu0
    %v155 = vadd.f32 %v97, %v154
    %v156 = vpop.f32.mrb[0].mxu0
    %v157 = vpop.f32.mrb[0].mxu0
    %v158 = vadd.f32 %v97, %v157
    %v159 = vpop.f32.mrb[0].mxu0
    %160 = vdwg.mxu0
    %v161 = vmax.f32 %v155, 0.0
    %v162 = vmax.f32 %v158, 0.0
    %v163 = vpack.c.bf16 %v162, %v161
    %v164 = vld [vmem:[#allocation8] sm:$0xf]
    %v165 = vld [vmem:[#allocation8 + $0x4] sm:$0xf]
    %v166 = vld [vmem:[#allocation8 + $0x8] sm:$0xf]
    %v167 = vld [vmem:[#allocation8 + $0xc] sm:$0xf]
    %v168 = vld [vmem:[#allocation8 + $0x10] sm:$0xf]
    %v169 = vld [vmem:[#allocation8 + $0x14] sm:$0xf]
    %v170 = vld [vmem:[#allocation8 + $0x18] sm:$0xf]
    %v171 = vld [vmem:[#allocation8 + $0x1c] sm:$0xf]
    %v172 = vld [vmem:[#allocation8 + $0x20] sm:$0xf]
    %v173 = vld [vmem:[#allocation8 + $0x24] sm:$0xf]
    %v174 = vld [vmem:[#allocation8 + $0x28] sm:$0xf]
    %v175 = vld [vmem:[#allocation8 + $0x2c] sm:$0xf]
    %v176 = vld [vmem:[#allocation8 + $0x30] sm:$0xf]
    %v177 = vld [vmem:[#allocation8 + $0x34] sm:$0xf]
    %v178 = vld [vmem:[#allocation8 + $0x38] sm:$0xf]
    %v179 = vld [vmem:[#allocation8 + $0x3c] sm:$0xf]
    %v180 = vld [vmem:[#allocation10] sm:$0x1]
    %v182 = vlaneseq
    %v183 = vshrl.u32 %v182, 7
    %v184 = vsub.s32 0, %v183
    %v185 = vrot.slane %v180, %v184
    %v203 = vunpack.c.l.b16 %v164
    %v204 = vunpack.c.l.b16 %v165
    %v205 = vunpack.c.l.b16 %v166
    %v206 = vunpack.c.l.b16 %v167
    %v207 = vunpack.c.l.b16 %v168
    %v208 = vunpack.c.l.b16 %v169
    %v209 = vunpack.c.l.b16 %v170
    %v210 = vunpack.c.l.b16 %v171
    %v211 = vunpack.c.l.b16 %v172
    %v212 = vunpack.c.l.b16 %v173
    %v213 = vunpack.c.l.b16 %v174
    %v214 = vunpack.c.l.b16 %v175
    %v215 = vunpack.c.l.b16 %v176
    %v216 = vunpack.c.l.b16 %v177
    %v217 = vunpack.c.l.b16 %v178
    %v218 = vunpack.c.l.b16 %v179
    %v219 = vpack.c.b16 %v204, %v203
    %v220 = vpack.c.b16 %v206, %v205
    %v221 = vpack.c.b16 %v208, %v207
    %v222 = vpack.c.b16 %v210, %v209
    %v223 = vpack.c.b16 %v212, %v211
    %v224 = vpack.c.b16 %v214, %v213
    %v225 = vpack.c.b16 %v216, %v215
    %v226 = vpack.c.b16 %v218, %v217
    %235 = vmatprep.subr.bf16.mxu0 0
    %236 = vmatpush1.bf16.msra.mxu0 %v219
    %237 = vmatprep.subr.bf16.mxu0 0
    %238 = vmatpush1.bf16.msra.mxu0 %v220
    %239 = vmatprep.subr.bf16.mxu0 0
    %240 = vmatpush1.bf16.msra.mxu0 %v221
    %241 = vmatprep.subr.bf16.mxu0 0
    %242 = vmatpush1.bf16.msra.mxu0 %v222
    %243 = vmatprep.subr.bf16.mxu0 0
    %244 = vmatpush1.bf16.msra.mxu0 %v223
    %245 = vmatprep.subr.bf16.mxu0 0
    %246 = vmatpush1.bf16.msra.mxu0 %v224
    %247 = vmatprep.subr.bf16.mxu0 0
    %248 = vmatpush1.bf16.msra.mxu0 %v225
    %249 = vmatprep.subr.bf16.mxu0 0
    %250 = vmatpush1.bf16.msra.mxu0 %v226
    %251 = vmatprep.subr.bf16.mxu0 0
    %252 = vmatpush1.bf16.msra.mxu0 0
    %253 = vmatprep.subr.bf16.mxu0 0
    %254 = vmatpush1.bf16.msra.mxu0 0
    %255 = vmatprep.subr.bf16.mxu0 0
    %256 = vmatpush1.bf16.msra.mxu0 0
    %257 = vmatprep.subr.bf16.mxu0 0
    %258 = vmatpush1.bf16.msra.mxu0 0
    %259 = vmatprep.subr.bf16.mxu0 0
    %260 = vmatpush1.bf16.msra.mxu0 0
    %261 = vmatprep.subr.bf16.mxu0 0
    %262 = vmatpush1.bf16.msra.mxu0 0
    %263 = vmatprep.subr.bf16.mxu0 0
    %264 = vmatpush1.bf16.msra.mxu0 0
    %265 = vmatprep.subr.bf16.mxu0 0
    %266 = vmatpush1.bf16.msra.mxu0 0
    %267 = vmatprep.mubr.bf16.mxu0 0
    %268 = vmatmul.mubr.bf16.gmra.mrb[0].mxu0 %v163
    %v269 = vpop.f32.mrb[0].mxu0
    %v270 = vadd.f32 %v185, %v269
    %v271 = vpop.f32.mrb[0].mxu0
    %v272 = vpop.f32.mrb[0].mxu0
    %v273 = vadd.f32 %v185, %v272
    %v274 = vpop.f32.mrb[0].mxu0
    %275 = vdwg.mxu0
    %v276 = vmax.f32 %v270, 0.0
    %v277 = vmax.f32 %v273, 0.0
    %278 = vst [vmem:[#allocation11] sm:$0xff] %v276
    %279 = vst [vmem:[#allocation11 + $0x8] sm:$0xff] %v277
    // Predicated region
    $region42: #{tpu_custom_call.1} parent=1 // pred_check
      _
    $region43: #{tpu_custom_call.1} parent=1 // pred_check_branch
      %281 = sbr.rel (0) target = $region45
    $region44: #{tpu_custom_call.1} parent=1 // pred_region
      %s283 = ssub.s32 256, 256
      %284 = vsyncadd [#allocation4], %s283
      %s285 = sshll.u32 [#allocation11], 4
      %s286 = int_to_ptr.vmem [resolvable:$true] %s285
      %291 = dma.vmem_to_hbm [thread:$0]  %s286, 256, %s5, [#allocation4], 128, 128, 8
    $region45: #{tpu_custom_call.1} parent=1 // pred_fallthru
      _
    // Predicated region
    $region46: #{tpu_custom_call.1} parent=1 // pred_check
      _
    $region47: #{tpu_custom_call.1} parent=1 // pred_check_branch
      %293 = sbr.rel (0) target = $region49
    $region48: #{tpu_custom_call.1} parent=1 // pred_region
      %294 = dma.done [#allocation4], 256
    $region49: #{tpu_custom_call.1} parent=1 // pred_fallthru
      _
    %295 = vsyncpa [#allocation3], 1
    %296 = vsyncpa [#allocation6], 1
    %297 = vsyncpa [#allocation9], 1
    %298 = vsyncpa [#allocation4], 1

</llo_original>
